<compile_context>
chip_gen: v5e
topology: v5e:2x2
jax: 0.10.0
libtpu: 0.0.40
codegen_flags: <defaults>
</compile_context>

<pallas_src>
import functools

import jax
import jax.numpy as jnp
from jax.experimental import pallas as pl
from jax.experimental.pallas import tpu as pltpu

BN_EPS = 1e-5


def _round_up(v, m):
    return (v + m - 1) // m * m


def _cdiv(a, b):
    return -(-a // b)


def _stats_kernel(x_ref, colsum_ref, gram_ref, *, compute_dtype):
    """Phase 1: accumulate colsum(x) (1,Cin) and Gram = x^T x (Cin,Cin) in f32.

    Grid = (splits, tiles_per_split); the accumulators are resident across the inner
    ("arbitrary") axis and indexed by the outer ("parallel") split axis, so on v7x the
    two TensorCores each produce an independent partial sum.
    """
    j = pl.program_id(1)

    @pl.when(j == 0)
    def _init():
        colsum_ref[...] = jnp.zeros_like(colsum_ref)
        gram_ref[...] = jnp.zeros_like(gram_ref)

    xb = x_ref[...].astype(compute_dtype)          # in-kernel cast (no host pass)
    colsum_ref[...] += jnp.sum(xb.astype(jnp.float32), axis=0, keepdims=True)[None]
    # x^T x on the MXU: contract the row axis of both operands (same dim-number
    # pattern as splash-attention's dkv backward), f32 accumulation.
    gram_ref[...] += jax.lax.dot_general(
        xb, xb,
        dimension_numbers=(((0,), (0,)), ((), ())),
        preferred_element_type=jnp.float32)[None]


def _apply_kernel(x_ref, w_ref, scale_ref, shift_ref, o_ref):
    """Phase 2: y = x @ W (recomputed), then relu(y * scale + shift), slim store."""
    xb = x_ref[...].astype(w_ref.dtype)
    y = jnp.dot(xb, w_ref[...], preferred_element_type=jnp.float32)
    o_ref[...] = jnp.maximum(y * scale_ref[...] + shift_ref[...], 0.0).astype(o_ref.dtype)


def simple_layer_forward(pxo, weight, bias, gamma, beta, *,
                         phase1_tile=32768, phase2_tile=8192,
                         compute_dtype=jnp.bfloat16, out_dtype=None):
    """pxo = (p, x, o): p (N,3) coords, x (N, Cin) features, o (B,) offsets.
    Only x is consumed by SimpleLayer.forward, matching the PyTorch module.

    `bias` is accepted for interface parity but is mathematically cancelled by the
    BatchNorm mean subtraction, so it is never loaded by the kernels.
    `out_dtype=None` keeps x.dtype; pass jnp.bfloat16 to halve the output writeback.
    """
    _p, x, _o = pxo
    n, c_in = x.shape
    c_out = weight.shape[0]
    if out_dtype is None:
        out_dtype = x.dtype
    del bias  # exactly cancelled by BN's mean subtraction

    # ---- tile / padding geometry --------------------------------------------------
    if phase1_tile >= n and phase2_tile >= n:
        # Single-tile fast path: block dims equal full dims (legal for any N),
        # no row padding, no epilogue slice.
        tn1 = tn2 = n
        splits, tps = 1, 1
        n_pad1 = n_pad2 = n_pad = n
    else:
        n16 = _round_up(n, 16)                       # bf16 packs 16 sublanes / vreg
        tn1 = min(_round_up(min(phase1_tile, n), 16), n16)
        tn2 = min(_round_up(min(phase2_tile, n), 16), n16)
        tiles1 = _cdiv(n, tn1)
        splits = 2 if tiles1 >= 2 else 1             # v7x: phase-1 rows across 2 TCs
        tps = _cdiv(tiles1, splits)
        n_pad1 = splits * tps * tn1
        n_pad2 = _round_up(n, tn2)
        n_pad = max(n_pad1, n_pad2)

    # Zero row padding only when required (zeros contribute nothing to the stats).
    x_p = x if n_pad == n else jnp.pad(x, ((0, n_pad - n), (0, 0)))
    w_t = weight.T.astype(compute_dtype)             # (Cin, Cout): the MXU operand

    # ---- phase 1: colsum(x) and x^T x per core-split ------------------------------
    colsum, gram = pl.pallas_call(
        functools.partial(_stats_kernel, compute_dtype=compute_dtype),
        grid=(splits, tps),
        in_specs=[pl.BlockSpec((tn1, c_in), lambda c, j: (c * tps + j, 0))],
        out_specs=(pl.BlockSpec((1, 1, c_in), lambda c, j: (c, 0, 0)),
                   pl.BlockSpec((1, c_in, c_in), lambda c, j: (c, 0, 0))),
        out_shape=(jax.ShapeDtypeStruct((splits, 1, c_in), jnp.float32),
                   jax.ShapeDtypeStruct((splits, c_in, c_in), jnp.float32)),
        compiler_params=pltpu.CompilerParams(
            dimension_semantics=("parallel", "arbitrary")),
    )(x_p)

    # ---- tiny host-side finalize: fold BN into per-channel (scale, shift) ---------
    w_f32 = w_t.astype(jnp.float32)                  # identical values to MXU operand
    sx = jnp.sum(colsum, axis=(0, 1))                # (Cin,)  combine core partials
    g = jnp.sum(gram, axis=0)                        # (Cin, Cin)
    s1 = sx @ w_f32                                  # sum_i y_i   per channel
    s2 = jnp.sum(w_f32 * (g @ w_f32), axis=0)        # sum_i y_i^2 per channel
    inv_n = jnp.float32(1.0 / n)
    mean = s1 * inv_n
    var = jnp.maximum(s2 * inv_n - mean * mean, 0.0)  # biased batch variance
    scale = gamma.astype(jnp.float32) * jax.lax.rsqrt(var + BN_EPS)
    shift = beta.astype(jnp.float32) - mean * scale
    scale = scale.reshape(1, c_out)
    shift = shift.reshape(1, c_out)

    # ---- phase 2: out = relu((x @ W) * scale + shift), slim (tn2, Cout) stores ----
    out = pl.pallas_call(
        _apply_kernel,
        grid=(n_pad2 // tn2,),
        in_specs=[pl.BlockSpec((tn2, c_in), lambda i: (i, 0)),
                  pl.BlockSpec((c_in, c_out), lambda i: (0, 0)),   # resident
                  pl.BlockSpec((1, c_out), lambda i: (0, 0)),      # resident
                  pl.BlockSpec((1, c_out), lambda i: (0, 0))],     # resident
        out_specs=pl.BlockSpec((tn2, c_out), lambda i: (i, 0)),
        out_shape=jax.ShapeDtypeStruct((n_pad2, c_out), out_dtype),
        compiler_params=pltpu.CompilerParams(
            dimension_semantics=("parallel",)),
    )(x_p, w_t, scale, shift)

    # Padded rows (if any) hold relu(shift) garbage; drop them. With no row padding
    # the slice (and its extra HBM pass) is skipped entirely.
    return out if n_pad2 == n else out[:n]


def _reference(x, weight, bias, gamma, beta, compute_dtype=jnp.float32):
    """Pure-JAX reference (same matmul input dtype as the kernel, BN math in f32)."""
    y = jnp.dot(x.astype(compute_dtype), weight.T.astype(compute_dtype),
                preferred_element_type=jnp.float32) + bias
    mean = y.mean(axis=0, keepdims=True)
    var = ((y - mean) ** 2).mean(axis=0, keepdims=True)
    y = (y - mean) / jnp.sqrt(var + BN_EPS) * gamma + beta
    return jnp.maximum(y, 0.0)


if __name__ == "__main__":
    key = jax.random.PRNGKey(0)
    k_p, k_x, k_w, k_b, k_g, k_be = jax.random.split(key, 6)

    N = 1000           # points (BatchNorm1d batch axis)
    in_planes = 16
    out_planes = 32

    # pxo tuple, matching PointTransformer conventions
    p = jax.random.normal(k_p, (N, 3), dtype=jnp.float32)           # coords (unused)
    x = jax.random.normal(k_x, (N, in_planes), dtype=jnp.float32)   # features
    o = jnp.array([N], dtype=jnp.int32)                             # offsets (unused)

    weight = 0.1 * jax.random.normal(k_w, (out_planes, in_planes), dtype=jnp.float32)
    bias = 0.1 * jax.random.normal(k_b, (out_planes,), dtype=jnp.float32)
    gamma = 1.0 + 0.05 * jax.random.normal(k_g, (out_planes,), dtype=jnp.float32)
    beta = 0.05 * jax.random.normal(k_be, (out_planes,), dtype=jnp.float32)

    # Reference with the same bf16 matmul inputs (it keeps the bias the kernel drops;
    # BN cancels it exactly), BN math in f32.
    ref = _reference(x, weight, bias, gamma, beta, compute_dtype=jnp.bfloat16)

    # (a) Default tiles: single-tile fast path — no row padding, no epilogue slice.
    out_a = simple_layer_forward((p, x, o), weight, bias, gamma, beta)
    out_a = jax.block_until_ready(out_a)
    assert out_a.shape == (N, out_planes) and out_a.dtype == x.dtype
    assert jnp.allclose(out_a, ref, atol=1e-3, rtol=1e-3), "fast-path mismatch"

    # (b) Small tiles: exercises the multi-tile grids, the 2-way phase-1 core split,
    #     row padding + epilogue slice, and the bf16 output path.
    out_b = simple_layer_forward((p, x, o), weight, bias, gamma, beta,
                                 phase1_tile=256, phase2_tile=256,
                                 out_dtype=jnp.bfloat16)
    out_b = jax.block_until_ready(out_b)
    assert out_b.shape == (N, out_planes) and out_b.dtype == jnp.bfloat16
    assert jnp.allclose(out_b.astype(jnp.float32), ref, atol=2.5e-2, rtol=2.5e-2), \
        "tiled/bf16-path mismatch"

    print("KERNEL_OK")
</pallas_src>

<mosaic_0001>
module attributes {stable_mosaic.version = 11 : i64} {
  func.func @_stats_kernel(%arg0: i32, %arg1: i32, %arg2: memref<1000x16xf32, #tpu.memory_space<vmem>>, %arg3: memref<1x1x16xf32, #tpu.memory_space<vmem>>, %arg4: memref<1x16x16xf32, #tpu.memory_space<vmem>>) attributes {dimension_semantics = [#tpu.dimension_semantics<parallel>, #tpu.dimension_semantics<arbitrary>], iteration_bounds = array<i64: 1, 1>, scalar_prefetch = 0 : i64, scratch_operands = 0 : i64, tpu.core_type = #tpu.core_type<tc>, window_params = [{transform_indices = @transform_0, window_bounds = array<i64: 1000, 16>}, {transform_indices = @transform_1, window_bounds = array<i64: 1, 1, 16>}, {transform_indices = @transform_2, window_bounds = array<i64: 1, 16, 16>}]} {
    %c0_i32 = arith.constant 0 : i32
    %0 = arith.cmpi eq, %arg1, %c0_i32 : i32
    %1 = arith.extui %0 : i1 to i32
    %c0_i32_0 = arith.constant 0 : i32
    %2 = arith.cmpi ne, %1, %c0_i32_0 : i32
    scf.if %2 {
      %cst_15 = arith.constant 0.000000e+00 : f32
      %17 = vector.broadcast %cst_15 : f32 to vector<1x1x16xf32>
      %c0_16 = arith.constant 0 : index
      %c0_17 = arith.constant 0 : index
      %c0_18 = arith.constant 0 : index
      %18 = vector.load %arg3[%c0_16, %c0_17, %c0_18] : memref<1x1x16xf32, #tpu.memory_space<vmem>>, vector<1x1x16xf32>
      tpu.vector_store %arg3[%c0_16, %c0_17, %c0_18], %17 {strides = array<i32>} : memref<1x1x16xf32, #tpu.memory_space<vmem>>, vector<1x1x16xf32>,
      %cst_19 = arith.constant 0.000000e+00 : f32
      %19 = vector.broadcast %cst_19 : f32 to vector<1x16x16xf32>
      %c0_20 = arith.constant 0 : index
      %c0_21 = arith.constant 0 : index
      %c0_22 = arith.constant 0 : index
      %20 = vector.load %arg4[%c0_20, %c0_21, %c0_22] : memref<1x16x16xf32, #tpu.memory_space<vmem>>, vector<1x16x16xf32>
      tpu.vector_store %arg4[%c0_20, %c0_21, %c0_22], %19 {strides = array<i32>} : memref<1x16x16xf32, #tpu.memory_space<vmem>>, vector<1x16x16xf32>,
    } else {
    }
    %c0 = arith.constant 0 : index
    %c0_1 = arith.constant 0 : index
    %3 = vector.load %arg2[%c0, %c0_1] : memref<1000x16xf32, #tpu.memory_space<vmem>>, vector<1000x16xf32>
    %4 = arith.truncf %3 : vector<1000x16xf32> to vector<1000x16xbf16>
    %c0_2 = arith.constant 0 : index
    %c0_3 = arith.constant 0 : index
    %c0_4 = arith.constant 0 : index
    %5 = vector.load %arg3[%c0_2, %c0_3, %c0_4] : memref<1x1x16xf32, #tpu.memory_space<vmem>>, vector<1x1x16xf32>
    %6 = arith.extf %4 : vector<1000x16xbf16> to vector<1000x16xf32>
    %cst = arith.constant dense<0.000000e+00> : vector<16xf32>
    %7 = vector.multi_reduction <add>, %6, %cst [0] : vector<1000x16xf32> to vector<16xf32>
    %8 = vector.shape_cast %7 : vector<16xf32> to vector<1x16xf32>
    %9 = vector.shape_cast %8 : vector<1x16xf32> to vector<1x1x16xf32>
    %10 = arith.addf %5, %9 : vector<1x1x16xf32>
    %c0_5 = arith.constant 0 : index
    %c0_6 = arith.constant 0 : index
    %c0_7 = arith.constant 0 : index
    %11 = vector.load %arg3[%c0_5, %c0_6, %c0_7] : memref<1x1x16xf32, #tpu.memory_space<vmem>>, vector<1x1x16xf32>
    tpu.vector_store %arg3[%c0_5, %c0_6, %c0_7], %10 {strides = array<i32>} : memref<1x1x16xf32, #tpu.memory_space<vmem>>, vector<1x1x16xf32>,
    %c0_8 = arith.constant 0 : index
    %c0_9 = arith.constant 0 : index
    %c0_10 = arith.constant 0 : index
    %12 = vector.load %arg4[%c0_8, %c0_9, %c0_10] : memref<1x16x16xf32, #tpu.memory_space<vmem>>, vector<1x16x16xf32>
    %cst_11 = arith.constant dense<0.000000e+00> : vector<16x16xf32>
    %13 = tpu.matmul %4, %4, %cst_11 {dimension_numbers = #tpu.dot_dimension_numbers<[0], [0], [1], [1], [0, 1, 1, 1], [], []>} : vector<1000x16xbf16>, vector<1000x16xbf16>, vector<16x16xf32> -> vector<16x16xf32>
    %14 = vector.shape_cast %13 : vector<16x16xf32> to vector<1x16x16xf32>
    %15 = arith.addf %12, %14 : vector<1x16x16xf32>
    %c0_12 = arith.constant 0 : index
    %c0_13 = arith.constant 0 : index
    %c0_14 = arith.constant 0 : index
    %16 = vector.load %arg4[%c0_12, %c0_13, %c0_14] : memref<1x16x16xf32, #tpu.memory_space<vmem>>, vector<1x16x16xf32>
    tpu.vector_store %arg4[%c0_12, %c0_13, %c0_14], %15 {strides = array<i32>} : memref<1x16x16xf32, #tpu.memory_space<vmem>>, vector<1x16x16xf32>,
    return
  }
  func.func @transform_0(%arg0: i32, %arg1: i32) -> (i32, i32) {
    %c1_i32 = arith.constant 1 : i32
    %0 = arith.muli %arg0, %c1_i32 : i32
    %1 = arith.addi %0, %arg1 : i32
    %c0_i32 = arith.constant 0 : i32
    %c0_i32_0 = arith.constant 0 : i32
    return %1, %c0_i32 : i32, i32
  }
  func.func @transform_1(%arg0: i32, %arg1: i32) -> (i32, i32, i32) {
    %c0_i32 = arith.constant 0 : i32
    %c0_i32_0 = arith.constant 0 : i32
    %c0_i32_1 = arith.constant 0 : i32
    return %arg0, %c0_i32, %c0_i32_0 : i32, i32, i32
  }
  func.func @transform_2(%arg0: i32, %arg1: i32) -> (i32, i32, i32) {
    %c0_i32 = arith.constant 0 : i32
    %c0_i32_0 = arith.constant 0 : i32
    %c0_i32_1 = arith.constant 0 : i32
    return %arg0, %c0_i32, %c0_i32_0 : i32, i32, i32
  }
}

</mosaic_0001>

<llo_original>
// kernel: tpu_custom_call.1
$region0: #{tpu_custom_call.1}
  #allocation0 [shape = 'u32[]', space=smem, size = 0x4, offset = 0x4, fixed_abs, tag = 'smem constant byte address 0x4 - core index']
  #allocation1 [shape = 'u32[72,128]{1,0:T(1,128)}', space=vmem, size = 0x9000, scoped, tag = 'internal scratch']
  %s0 = inlined_call_operand.vmem [shape: f32[1000,16], index: 0, kind: input, shape index: {}]
  %s1 = inlined_call_operand.hbm [shape: f32[1,1,16], index: 1, kind: output, shape index: {0}]
  %s2 = inlined_call_operand.hbm [shape: f32[1,16,16], index: 2, kind: output, shape index: {1}]
  %3 = xla_tuple %s1, %s2
  %s4 = sld [smem:[#allocation0]]
  $region26: #{tpu_custom_call.1} parent=0
    _
  %s6 = ssub.s32 1, %s4
  %s7 = scalar_select 0, %s6, %s4
  $region1: #{tpu_custom_call.1} parent=0
    #allocation2 [shape = 'u8[512]{0}', space=vmem, size = 0x400, scoped, tag = 'output window, operand 0, single buffered']
    #allocation3 [shape = 's32[1]{0}', space=sflag, size = 0x4, scoped, tag = 'scoped memory for tpu_custom_call.1']
    #allocation4 [shape = 'u8[8192]{0}', space=vmem, size = 0x2000, scoped, tag = 'output window, operand 1, single buffered']
    #allocation5 [shape = 's32[1]{0}', space=sflag, size = 0x4, scoped, tag = 'scoped memory for tpu_custom_call.1']
    %8 = vsyncpa [#allocation3], 0
    %9 = vsyncpa [#allocation5], 0
    // Predicated region
    $region2: #{tpu_custom_call.1} parent=1 // pred_check
      _
    $region3: #{tpu_custom_call.1} parent=1 // pred_check_branch
      %11 = sbr.rel (0) target = $region5
    $region4: #{tpu_custom_call.1} parent=1 // pred_region
      %s12 = sadd.s32 0, 0
      %s13 = smul.u32 125, %s12
      %p14 = scmp.lt.s32.totalorder %s13, 124
      %s15 = scalar_select %p14, %s13, 124
      %s16 = smul.addr %s15, 8
      %s17 = scalar_lea.vmem %s0, %s16
      %s18 = sadd.s32 0, 0
      %s19 = smul.u32 125, %s18
    $region5: #{tpu_custom_call.1} parent=1 // pred_fallthru
      _
    %s20 = sadd.s32 0, 0
    %s21 = smul.u32 125, %s20
    %p22 = scmp.lt.s32.totalorder %s21, 124
    %s23 = scalar_select %p22, %s21, 124
    %s24 = smul.addr %s23, 8
    %s25 = scalar_lea.vmem %s0, %s24
    %s26 = sadd.s32 0, 0
    %s27 = smul.u32 125, %s26
    %p28 = scmp.lt.s32.totalorder %s27, 124
    %s29 = scalar_select %p28, %s27, 124
    %s30 = smul.addr %s29, 8
    %s31 = scalar_lea.vmem %s0, %s30
    %s32 = sadd.s32 0, 0
    %s33 = smul.u32 125, %s32
    %p35 = scmp.eq.s32.totalorder 0, 0
    // Predicated region
    $region6: #{tpu_custom_call.1} parent=1 // pred_check
      %p36 = pneg %p35
    $region7: #{tpu_custom_call.1} parent=1 // pred_check_branch
      %38 = sbr.rel (%p36) target = $region9
    $region8: #{tpu_custom_call.1} parent=1 // pred_region
      %vm39 = vcmask 122880
      %40 = vst.msk [vmem:[#allocation2] sm:$0x1] %vm39, 0.0
      %vm41 = vcmask 130048
      %42 = vst.msk [vmem:[#allocation4] sm:$0xff] %vm41, 0.0
      %43 = vst.msk [vmem:[#allocation4 + $0x8] sm:$0xff] %vm41, 0.0
    $region9: #{tpu_custom_call.1} parent=1 // pred_fallthru
      _
    %v44 = vld [vmem:[%s31] sm:$0xff]
    %v45 = vld [vmem:[%s31 + $0x8] sm:$0xff]
    %v46 = vld [vmem:[%s31 + $0x10] sm:$0xff]
    %v47 = vld [vmem:[%s31 + $0x18] sm:$0xff]
    %v48 = vld [vmem:[%s31 + $0x20] sm:$0xff]
    %v49 = vld [vmem:[%s31 + $0x28] sm:$0xff]
    %v50 = vld [vmem:[%s31 + $0x30] sm:$0xff]
    %v51 = vld [vmem:[%s31 + $0x38] sm:$0xff]
    %v52 = vld [vmem:[%s31 + $0x40] sm:$0xff]
    %v53 = vld [vmem:[%s31 + $0x48] sm:$0xff]
    %v54 = vld [vmem:[%s31 + $0x50] sm:$0xff]
    %v55 = vld [vmem:[%s31 + $0x58] sm:$0xff]
    %v56 = vld [vmem:[%s31 + $0x60] sm:$0xff]
    %v57 = vld [vmem:[%s31 + $0x68] sm:$0xff]
    %v58 = vld [vmem:[%s31 + $0x70] sm:$0xff]
    %v59 = vld [vmem:[%s31 + $0x78] sm:$0xff]
    %v60 = vld [vmem:[%s31 + $0x80] sm:$0xff]
    %v61 = vld [vmem:[%s31 + $0x88] sm:$0xff]
    %v62 = vld [vmem:[%s31 + $0x90] sm:$0xff]
    %v63 = vld [vmem:[%s31 + $0x98] sm:$0xff]
    %v64 = vld [vmem:[%s31 + $0xa0] sm:$0xff]
    %v65 = vld [vmem:[%s31 + $0xa8] sm:$0xff]
    %v66 = vld [vmem:[%s31 + $0xb0] sm:$0xff]
    %v67 = vld [vmem:[%s31 + $0xb8] sm:$0xff]
    %v68 = vld [vmem:[%s31 + $0xc0] sm:$0xff]
    %v69 = vld [vmem:[%s31 + $0xc8] sm:$0xff]
    %v70 = vld [vmem:[%s31 + $0xd0] sm:$0xff]
    %v71 = vld [vmem:[%s31 + $0xd8] sm:$0xff]
    %v72 = vld [vmem:[%s31 + $0xe0] sm:$0xff]
    %v73 = vld [vmem:[%s31 + $0xe8] sm:$0xff]
    %v74 = vld [vmem:[%s31 + $0xf0] sm:$0xff]
    %v75 = vld [vmem:[%s31 + $0xf8] sm:$0xff]
    %v76 = vld [vmem:[%s31 + $0x100] sm:$0xff]
    %v77 = vld [vmem:[%s31 + $0x108] sm:$0xff]
    %v78 = vld [vmem:[%s31 + $0x110] sm:$0xff]
    %v79 = vld [vmem:[%s31 + $0x118] sm:$0xff]
    %v80 = vld [vmem:[%s31 + $0x120] sm:$0xff]
    %v81 = vld [vmem:[%s31 + $0x128] sm:$0xff]
    %v82 = vld [vmem:[%s31 + $0x130] sm:$0xff]
    %v83 = vld [vmem:[%s31 + $0x138] sm:$0xff]
    %v84 = vld [vmem:[%s31 + $0x140] sm:$0xff]
    %v85 = vld [vmem:[%s31 + $0x148] sm:$0xff]
    %v86 = vld [vmem:[%s31 + $0x150] sm:$0xff]
    %v87 = vld [vmem:[%s31 + $0x158] sm:$0xff]
    %v88 = vld [vmem:[%s31 + $0x160] sm:$0xff]
    %v89 = vld [vmem:[%s31 + $0x168] sm:$0xff]
    %v90 = vld [vmem:[%s31 + $0x170] sm:$0xff]
    %v91 = vld [vmem:[%s31 + $0x178] sm:$0xff]
    %v92 = vld [vmem:[%s31 + $0x180] sm:$0xff]
    %v93 = vld [vmem:[%s31 + $0x188] sm:$0xff]
    %v94 = vld [vmem:[%s31 + $0x190] sm:$0xff]
    %v95 = vld [vmem:[%s31 + $0x198] sm:$0xff]
    %v96 = vld [vmem:[%s31 + $0x1a0] sm:$0xff]
    %v97 = vld [vmem:[%s31 + $0x1a8] sm:$0xff]
    %v98 = vld [vmem:[%s31 + $0x1b0] sm:$0xff]
    %v99 = vld [vmem:[%s31 + $0x1b8] sm:$0xff]
    %v100 = vld [vmem:[%s31 + $0x1c0] sm:$0xff]
    %v101 = vld [vmem:[%s31 + $0x1c8] sm:$0xff]
    %v102 = vld [vmem:[%s31 + $0x1d0] sm:$0xff]
    %v103 = vld [vmem:[%s31 + $0x1d8] sm:$0xff]
    %v104 = vld [vmem:[%s31 + $0x1e0] sm:$0xff]
    %v105 = vld [vmem:[%s31 + $0x1e8] sm:$0xff]
    %v106 = vld [vmem:[%s31 + $0x1f0] sm:$0xff]
    %v107 = vld [vmem:[%s31 + $0x1f8] sm:$0xff]
    %v108 = vld [vmem:[%s31 + $0x200] sm:$0xff]
    %v109 = vld [vmem:[%s31 + $0x208] sm:$0xff]
    %v110 = vld [vmem:[%s31 + $0x210] sm:$0xff]
    %v111 = vld [vmem:[%s31 + $0x218] sm:$0xff]
    %v112 = vld [vmem:[%s31 + $0x220] sm:$0xff]
    %v113 = vld [vmem:[%s31 + $0x228] sm:$0xff]
    %v114 = vld [vmem:[%s31 + $0x230] sm:$0xff]
    %v115 = vld [vmem:[%s31 + $0x238] sm:$0xff]
    %v116 = vld [vmem:[%s31 + $0x240] sm:$0xff]
    %v117 = vld [vmem:[%s31 + $0x248] sm:$0xff]
    %v118 = vld [vmem:[%s31 + $0x250] sm:$0xff]
    %v119 = vld [vmem:[%s31 + $0x258] sm:$0xff]
    %v120 = vld [vmem:[%s31 + $0x260] sm:$0xff]
    %v121 = vld [vmem:[%s31 + $0x268] sm:$0xff]
    %v122 = vld [vmem:[%s31 + $0x270] sm:$0xff]
    %v123 = vld [vmem:[%s31 + $0x278] sm:$0xff]
    %v124 = vld [vmem:[%s31 + $0x280] sm:$0xff]
    %v125 = vld [vmem:[%s31 + $0x288] sm:$0xff]
    %v126 = vld [vmem:[%s31 + $0x290] sm:$0xff]
    %v127 = vld [vmem:[%s31 + $0x298] sm:$0xff]
    %v128 = vld [vmem:[%s31 + $0x2a0] sm:$0xff]
    %v129 = vld [vmem:[%s31 + $0x2a8] sm:$0xff]
    %v130 = vld [vmem:[%s31 + $0x2b0] sm:$0xff]
    %v131 = vld [vmem:[%s31 + $0x2b8] sm:$0xff]
    %v132 = vld [vmem:[%s31 + $0x2c0] sm:$0xff]
    %v133 = vld [vmem:[%s31 + $0x2c8] sm:$0xff]
    %v134 = vld [vmem:[%s31 + $0x2d0] sm:$0xff]
    %v135 = vld [vmem:[%s31 + $0x2d8] sm:$0xff]
    %v136 = vld [vmem:[%s31 + $0x2e0] sm:$0xff]
    %v137 = vld [vmem:[%s31 + $0x2e8] sm:$0xff]
    %v138 = vld [vmem:[%s31 + $0x2f0] sm:$0xff]
    %v139 = vld [vmem:[%s31 + $0x2f8] sm:$0xff]
    %v140 = vld [vmem:[%s31 + $0x300] sm:$0xff]
    %v141 = vld [vmem:[%s31 + $0x308] sm:$0xff]
    %v142 = vld [vmem:[%s31 + $0x310] sm:$0xff]
    %v143 = vld [vmem:[%s31 + $0x318] sm:$0xff]
    %v144 = vld [vmem:[%s31 + $0x320] sm:$0xff]
    %v145 = vld [vmem:[%s31 + $0x328] sm:$0xff]
    %v146 = vld [vmem:[%s31 + $0x330] sm:$0xff]
    %v147 = vld [vmem:[%s31 + $0x338] sm:$0xff]
    %v148 = vld [vmem:[%s31 + $0x340] sm:$0xff]
    %v149 = vld [vmem:[%s31 + $0x348] sm:$0xff]
    %v150 = vld [vmem:[%s31 + $0x350] sm:$0xff]
    %v151 = vld [vmem:[%s31 + $0x358] sm:$0xff]
    %v152 = vld [vmem:[%s31 + $0x360] sm:$0xff]
    %v153 = vld [vmem:[%s31 + $0x368] sm:$0xff]
    %v154 = vld [vmem:[%s31 + $0x370] sm:$0xff]
    %v155 = vld [vmem:[%s31 + $0x378] sm:$0xff]
    %v156 = vld [vmem:[%s31 + $0x380] sm:$0xff]
    %v157 = vld [vmem:[%s31 + $0x388] sm:$0xff]
    %v158 = vld [vmem:[%s31 + $0x390] sm:$0xff]
    %v159 = vld [vmem:[%s31 + $0x398] sm:$0xff]
    %v160 = vld [vmem:[%s31 + $0x3a0] sm:$0xff]
    %v161 = vld [vmem:[%s31 + $0x3a8] sm:$0xff]
    %v162 = vld [vmem:[%s31 + $0x3b0] sm:$0xff]
    %v163 = vld [vmem:[%s31 + $0x3b8] sm:$0xff]
    %v164 = vld [vmem:[%s31 + $0x3c0] sm:$0xff]
    %v165 = vld [vmem:[%s31 + $0x3c8] sm:$0xff]
    %v166 = vld [vmem:[%s31 + $0x3d0] sm:$0xff]
    %v167 = vld [vmem:[%s31 + $0x3d8] sm:$0xff]
    %v168 = vld [vmem:[%s31 + $0x3e0] sm:$0xff]
    %v169 = vpack.c.bf16 %v45, %v44
    %v170 = vpack.c.bf16 %v47, %v46
    %v171 = vpack.c.bf16 %v49, %v48
    %v172 = vpack.c.bf16 %v51, %v50
    %v173 = vpack.c.bf16 %v53, %v52
    %v174 = vpack.c.bf16 %v55, %v54
    %v175 = vpack.c.bf16 %v57, %v56
    %v176 = vpack.c.bf16 %v59, %v58
    %v177 = vpack.c.bf16 %v61, %v60
    %v178 = vpack.c.bf16 %v63, %v62
    %v179 = vpack.c.bf16 %v65, %v64
    %v180 = vpack.c.bf16 %v67, %v66
    %v181 = vpack.c.bf16 %v69, %v68
    %v182 = vpack.c.bf16 %v71, %v70
    %v183 = vpack.c.bf16 %v73, %v72
    %v184 = vpack.c.bf16 %v75, %v74
    %v185 = vpack.c.bf16 %v77, %v76
    %v186 = vpack.c.bf16 %v79, %v78
    %v187 = vpack.c.bf16 %v81, %v80
    %v188 = vpack.c.bf16 %v83, %v82
    %v189 = vpack.c.bf16 %v85, %v84
    %v190 = vpack.c.bf16 %v87, %v86
    %v191 = vpack.c.bf16 %v89, %v88
    %v192 = vpack.c.bf16 %v91, %v90
    %v193 = vpack.c.bf16 %v93, %v92
    %v194 = vpack.c.bf16 %v95, %v94
    %v195 = vpack.c.bf16 %v97, %v96
    %v196 = vpack.c.bf16 %v99, %v98
    %v197 = vpack.c.bf16 %v101, %v100
    %v198 = vpack.c.bf16 %v103, %v102
    %v199 = vpack.c.bf16 %v105, %v104
    %v200 = vpack.c.bf16 %v107, %v106
    %v201 = vpack.c.bf16 %v109, %v108
    %v202 = vpack.c.bf16 %v111, %v110
    %v203 = vpack.c.bf16 %v113, %v112
    %v204 = vpack.c.bf16 %v115, %v114
    %v205 = vpack.c.bf16 %v117, %v116
    %v206 = vpack.c.bf16 %v119, %v118
    %v207 = vpack.c.bf16 %v121, %v120
    %v208 = vpack.c.bf16 %v123, %v122
    %v209 = vpack.c.bf16 %v125, %v124
    %v210 = vpack.c.bf16 %v127, %v126
    %v211 = vpack.c.bf16 %v129, %v128
    %v212 = vpack.c.bf16 %v131, %v130
    %v213 = vpack.c.bf16 %v133, %v132
    %v214 = vpack.c.bf16 %v135, %v134
    %v215 = vpack.c.bf16 %v137, %v136
    %v216 = vpack.c.bf16 %v139, %v138
    %v217 = vpack.c.bf16 %v141, %v140
    %v218 = vpack.c.bf16 %v143, %v142
    %v219 = vpack.c.bf16 %v145, %v144
    %v220 = vpack.c.bf16 %v147, %v146
    %v221 = vpack.c.bf16 %v149, %v148
    %v222 = vpack.c.bf16 %v151, %v150
    %v223 = vpack.c.bf16 %v153, %v152
    %v224 = vpack.c.bf16 %v155, %v154
    %v225 = vpack.c.bf16 %v157, %v156
    %v226 = vpack.c.bf16 %v159, %v158
    %v227 = vpack.c.bf16 %v161, %v160
    %v228 = vpack.c.bf16 %v163, %v162
    %v229 = vpack.c.bf16 %v165, %v164
    %v230 = vpack.c.bf16 %v167, %v166
    %v231 = vpack.c.bf16 %v168, %v168
    %v232 = vld [vmem:[#allocation2] sm:$0x1]
    %v233 = vunpack.c.l.bf16 %v169
    %v234 = vunpack.c.h.bf16 %v169
    %v235 = vunpack.c.l.bf16 %v170
    %v236 = vunpack.c.h.bf16 %v170
    %v237 = vunpack.c.l.bf16 %v171
    %v238 = vunpack.c.h.bf16 %v171
    %v239 = vunpack.c.l.bf16 %v172
    %v240 = vunpack.c.h.bf16 %v172
    %v241 = vunpack.c.l.bf16 %v173
    %v242 = vunpack.c.h.bf16 %v173
    %v243 = vunpack.c.l.bf16 %v174
    %v244 = vunpack.c.h.bf16 %v174
    %v245 = vunpack.c.l.bf16 %v175
    %v246 = vunpack.c.h.bf16 %v175
    %v247 = vunpack.c.l.bf16 %v176
    %v248 = vunpack.c.h.bf16 %v176
    %v249 = vunpack.c.l.bf16 %v177
    %v250 = vunpack.c.h.bf16 %v177
    %v251 = vunpack.c.l.bf16 %v178
    %v252 = vunpack.c.h.bf16 %v178
    %v253 = vunpack.c.l.bf16 %v179
    %v254 = vunpack.c.h.bf16 %v179
    %v255 = vunpack.c.l.bf16 %v180
    %v256 = vunpack.c.h.bf16 %v180
    %v257 = vunpack.c.l.bf16 %v181
    %v258 = vunpack.c.h.bf16 %v181
    %v259 = vunpack.c.l.bf16 %v182
    %v260 = vunpack.c.h.bf16 %v182
    %v261 = vunpack.c.l.bf16 %v183
    %v262 = vunpack.c.h.bf16 %v183
    %v263 = vunpack.c.l.bf16 %v184
    %v264 = vunpack.c.h.bf16 %v184
    %v265 = vunpack.c.l.bf16 %v185
    %v266 = vunpack.c.h.bf16 %v185
    %v267 = vunpack.c.l.bf16 %v186
    %v268 = vunpack.c.h.bf16 %v186
    %v269 = vunpack.c.l.bf16 %v187
    %v270 = vunpack.c.h.bf16 %v187
    %v271 = vunpack.c.l.bf16 %v188
    %v272 = vunpack.c.h.bf16 %v188
    %v273 = vunpack.c.l.bf16 %v189
    %v274 = vunpack.c.h.bf16 %v189
    %v275 = vunpack.c.l.bf16 %v190
    %v276 = vunpack.c.h.bf16 %v190
    %v277 = vunpack.c.l.bf16 %v191
    %v278 = vunpack.c.h.bf16 %v191
    %v279 = vunpack.c.l.bf16 %v192
    %v280 = vunpack.c.h.bf16 %v192
    %v281 = vunpack.c.l.bf16 %v193
    %v282 = vunpack.c.h.bf16 %v193
    %v283 = vunpack.c.l.bf16 %v194
    %v284 = vunpack.c.h.bf16 %v194
    %v285 = vunpack.c.l.bf16 %v195
    %v286 = vunpack.c.h.bf16 %v195
    %v287 = vunpack.c.l.bf16 %v196
    %v288 = vunpack.c.h.bf16 %v196
    %v289 = vunpack.c.l.bf16 %v197
    %v290 = vunpack.c.h.bf16 %v197
    %v291 = vunpack.c.l.bf16 %v198
    %v292 = vunpack.c.h.bf16 %v198
    %v293 = vunpack.c.l.bf16 %v199
    %v294 = vunpack.c.h.bf16 %v199
    %v295 = vunpack.c.l.bf16 %v200
    %v296 = vunpack.c.h.bf16 %v200
    %v297 = vunpack.c.l.bf16 %v201
    %v298 = vunpack.c.h.bf16 %v201
    %v299 = vunpack.c.l.bf16 %v202
    %v300 = vunpack.c.h.bf16 %v202
    %v301 = vunpack.c.l.bf16 %v203
    %v302 = vunpack.c.h.bf16 %v203
    %v303 = vunpack.c.l.bf16 %v204
    %v304 = vunpack.c.h.bf16 %v204
    %v305 = vunpack.c.l.bf16 %v205
    %v306 = vunpack.c.h.bf16 %v205
    %v307 = vunpack.c.l.bf16 %v206
    %v308 = vunpack.c.h.bf16 %v206
    %v309 = vunpack.c.l.bf16 %v207
    %v310 = vunpack.c.h.bf16 %v207
    %v311 = vunpack.c.l.bf16 %v208
    %v312 = vunpack.c.h.bf16 %v208
    %v313 = vunpack.c.l.bf16 %v209
    %v314 = vunpack.c.h.bf16 %v209
    %v315 = vunpack.c.l.bf16 %v210
    %v316 = vunpack.c.h.bf16 %v210
    %v317 = vunpack.c.l.bf16 %v211
    %v318 = vunpack.c.h.bf16 %v211
    %v319 = vunpack.c.l.bf16 %v212
    %v320 = vunpack.c.h.bf16 %v212
    %v321 = vunpack.c.l.bf16 %v213
    %v322 = vunpack.c.h.bf16 %v213
    %v323 = vunpack.c.l.bf16 %v214
    %v324 = vunpack.c.h.bf16 %v214
    %v325 = vunpack.c.l.bf16 %v215
    %v326 = vunpack.c.h.bf16 %v215
    %v327 = vunpack.c.l.bf16 %v216
    %v328 = vunpack.c.h.bf16 %v216
    %v329 = vunpack.c.l.bf16 %v217
    %v330 = vunpack.c.h.bf16 %v217
    %v331 = vunpack.c.l.bf16 %v218
    %v332 = vunpack.c.h.bf16 %v218
    %v333 = vunpack.c.l.bf16 %v219
    %v334 = vunpack.c.h.bf16 %v219
    %v335 = vunpack.c.l.bf16 %v220
    %v336 = vunpack.c.h.bf16 %v220
    %v337 = vunpack.c.l.bf16 %v221
    %v338 = vunpack.c.h.bf16 %v221
    %v339 = vunpack.c.l.bf16 %v222
    %v340 = vunpack.c.h.bf16 %v222
    %v341 = vunpack.c.l.bf16 %v223
    %v342 = vunpack.c.h.bf16 %v223
    %v343 = vunpack.c.l.bf16 %v224
    %v344 = vunpack.c.h.bf16 %v224
    %v345 = vunpack.c.l.bf16 %v225
    %v346 = vunpack.c.h.bf16 %v225
    %v347 = vunpack.c.l.bf16 %v226
    %v348 = vunpack.c.h.bf16 %v226
    %v349 = vunpack.c.l.bf16 %v227
    %v350 = vunpack.c.h.bf16 %v227
    %v351 = vunpack.c.l.bf16 %v228
    %v352 = vunpack.c.h.bf16 %v228
    %v353 = vunpack.c.l.bf16 %v229
    %v354 = vunpack.c.h.bf16 %v229
    %v355 = vunpack.c.l.bf16 %v230
    %v356 = vunpack.c.h.bf16 %v230
    %v357 = vunpack.c.l.bf16 %v231
    %vm358 = vcmask 130048
    %v359 = vsel %vm358, %v233, 0.0
    %v360 = vsel %vm358, %v234, 0.0
    %v361 = vadd.f32 %v359, %v360
    %v362 = vsel %vm358, %v235, 0.0
    %v363 = vadd.f32 %v361, %v362
    %v364 = vsel %vm358, %v236, 0.0
    %v365 = vadd.f32 %v363, %v364
    %v366 = vsel %vm358, %v237, 0.0
    %v367 = vadd.f32 %v365, %v366
    %v368 = vsel %vm358, %v238, 0.0
    %v369 = vadd.f32 %v367, %v368
    %v370 = vsel %vm358, %v239, 0.0
    %v371 = vadd.f32 %v369, %v370
    %v372 = vsel %vm358, %v240, 0.0
    %v373 = vadd.f32 %v371, %v372
    %v374 = vsel %vm358, %v241, 0.0
    %v375 = vadd.f32 %v373, %v374
    %v376 = vsel %vm358, %v242, 0.0
    %v377 = vadd.f32 %v375, %v376
    %v378 = vsel %vm358, %v243, 0.0
    %v379 = vadd.f32 %v377, %v378
    %v380 = vsel %vm358, %v244, 0.0
    %v381 = vadd.f32 %v379, %v380
    %v382 = vsel %vm358, %v245, 0.0
    %v383 = vadd.f32 %v381, %v382
    %v384 = vsel %vm358, %v246, 0.0
    %v385 = vadd.f32 %v383, %v384
    %v386 = vsel %vm358, %v247, 0.0
    %v387 = vadd.f32 %v385, %v386
    %v388 = vsel %vm358, %v248, 0.0
    %v389 = vadd.f32 %v387, %v388
    %v390 = vsel %vm358, %v249, 0.0
    %v391 = vadd.f32 %v389, %v390
    %v392 = vsel %vm358, %v250, 0.0
    %v393 = vadd.f32 %v391, %v392
    %v394 = vsel %vm358, %v251, 0.0
    %v395 = vadd.f32 %v393, %v394
    %v396 = vsel %vm358, %v252, 0.0
    %v397 = vadd.f32 %v395, %v396
    %v398 = vsel %vm358, %v253, 0.0
    %v399 = vadd.f32 %v397, %v398
    %v400 = vsel %vm358, %v254, 0.0
    %v401 = vadd.f32 %v399, %v400
    %v402 = vsel %vm358, %v255, 0.0
    %v403 = vadd.f32 %v401, %v402
    %v404 = vsel %vm358, %v256, 0.0
    %v405 = vadd.f32 %v403, %v404
    %v406 = vsel %vm358, %v257, 0.0
    %v407 = vadd.f32 %v405, %v406
    %v408 = vsel %vm358, %v258, 0.0
    %v409 = vadd.f32 %v407, %v408
    %v410 = vsel %vm358, %v259, 0.0
    %v411 = vadd.f32 %v409, %v410
    %v412 = vsel %vm358, %v260, 0.0
    %v413 = vadd.f32 %v411, %v412
    %v414 = vsel %vm358, %v261, 0.0
    %v415 = vadd.f32 %v413, %v414
    %v416 = vsel %vm358, %v262, 0.0
    %v417 = vadd.f32 %v415, %v416
    %v418 = vsel %vm358, %v263, 0.0
    %v419 = vadd.f32 %v417, %v418
    %v420 = vsel %vm358, %v264, 0.0
    %v421 = vadd.f32 %v419, %v420
    %v422 = vsel %vm358, %v265, 0.0
    %v423 = vadd.f32 %v421, %v422
    %v424 = vsel %vm358, %v266, 0.0
    %v425 = vadd.f32 %v423, %v424
    %v426 = vsel %vm358, %v267, 0.0
    %v427 = vadd.f32 %v425, %v426
    %v428 = vsel %vm358, %v268, 0.0
    %v429 = vadd.f32 %v427, %v428
    %v430 = vsel %vm358, %v269, 0.0
    %v431 = vadd.f32 %v429, %v430
    %v432 = vsel %vm358, %v270, 0.0
    %v433 = vadd.f32 %v431, %v432
    %v434 = vsel %vm358, %v271, 0.0
    %v435 = vadd.f32 %v433, %v434
    %v436 = vsel %vm358, %v272, 0.0
    %v437 = vadd.f32 %v435, %v436
    %v438 = vsel %vm358, %v273, 0.0
    %v439 = vadd.f32 %v437, %v438
    %v440 = vsel %vm358, %v274, 0.0
    %v441 = vadd.f32 %v439, %v440
    %v442 = vsel %vm358, %v275, 0.0
    %v443 = vadd.f32 %v441, %v442
    %v444 = vsel %vm358, %v276, 0.0
    %v445 = vadd.f32 %v443, %v444
    %v446 = vsel %vm358, %v277, 0.0
    %v447 = vadd.f32 %v445, %v446
    %v448 = vsel %vm358, %v278, 0.0
    %v449 = vadd.f32 %v447, %v448
    %v450 = vsel %vm358, %v279, 0.0
    %v451 = vadd.f32 %v449, %v450
    %v452 = vsel %vm358, %v280, 0.0
    %v453 = vadd.f32 %v451, %v452
    %v454 = vsel %vm358, %v281, 0.0
    %v455 = vadd.f32 %v453, %v454
    %v456 = vsel %vm358, %v282, 0.0
    %v457 = vadd.f32 %v455, %v456
    %v458 = vsel %vm358, %v283, 0.0
    %v459 = vadd.f32 %v457, %v458
    %v460 = vsel %vm358, %v284, 0.0
    %v461 = vadd.f32 %v459, %v460
    %v462 = vsel %vm358, %v285, 0.0
    %v463 = vadd.f32 %v461, %v462
    %v464 = vsel %vm358, %v286, 0.0
    %v465 = vadd.f32 %v463, %v464
    %v466 = vsel %vm358, %v287, 0.0
    %v467 = vadd.f32 %v465, %v466
    %v468 = vsel %vm358, %v288, 0.0
    %v469 = vadd.f32 %v467, %v468
    %v470 = vsel %vm358, %v289, 0.0
    %v471 = vadd.f32 %v469, %v470
    %v472 = vsel %vm358, %v290, 0.0
    %v473 = vadd.f32 %v471, %v472
    %v474 = vsel %vm358, %v291, 0.0
    %v475 = vadd.f32 %v473, %v474
    %v476 = vsel %vm358, %v292, 0.0
    %v477 = vadd.f32 %v475, %v476
    %v478 = vsel %vm358, %v293, 0.0
    %v479 = vadd.f32 %v477, %v478
    %v480 = vsel %vm358, %v294, 0.0
    %v481 = vadd.f32 %v479, %v480
    %v482 = vsel %vm358, %v295, 0.0
    %v483 = vadd.f32 %v481, %v482
    %v484 = vsel %vm358, %v296, 0.0
    %v485 = vadd.f32 %v483, %v484
    %v486 = vsel %vm358, %v297, 0.0
    %v487 = vadd.f32 %v485, %v486
    %v488 = vsel %vm358, %v298, 0.0
    %v489 = vadd.f32 %v487, %v488
    %v490 = vsel %vm358, %v299, 0.0
    %v491 = vadd.f32 %v489, %v490
    %v492 = vsel %vm358, %v300, 0.0
    %v493 = vadd.f32 %v491, %v492
    %v494 = vsel %vm358, %v301, 0.0
    %v495 = vadd.f32 %v493, %v494
    %v496 = vsel %vm358, %v302, 0.0
    %v497 = vadd.f32 %v495, %v496
    %v498 = vsel %vm358, %v303, 0.0
    %v499 = vadd.f32 %v497, %v498
    %v500 = vsel %vm358, %v304, 0.0
    %v501 = vadd.f32 %v499, %v500
    %v502 = vsel %vm358, %v305, 0.0
    %v503 = vadd.f32 %v501, %v502
    %v504 = vsel %vm358, %v306, 0.0
    %v505 = vadd.f32 %v503, %v504
    %v506 = vsel %vm358, %v307, 0.0
    %v507 = vadd.f32 %v505, %v506
    %v508 = vsel %vm358, %v308, 0.0
    %v509 = vadd.f32 %v507, %v508
    %v510 = vsel %vm358, %v309, 0.0
    %v511 = vadd.f32 %v509, %v510
    %v512 = vsel %vm358, %v310, 0.0
    %v513 = vadd.f32 %v511, %v512
    %v514 = vsel %vm358, %v311, 0.0
    %v515 = vadd.f32 %v513, %v514
    %v516 = vsel %vm358, %v312, 0.0
    %v517 = vadd.f32 %v515, %v516
    %v518 = vsel %vm358, %v313, 0.0
    %v519 = vadd.f32 %v517, %v518
    %v520 = vsel %vm358, %v314, 0.0
    %v521 = vadd.f32 %v519, %v520
    %v522 = vsel %vm358, %v315, 0.0
    %v523 = vadd.f32 %v521, %v522
    %v524 = vsel %vm358, %v316, 0.0
    %v525 = vadd.f32 %v523, %v524
    %v526 = vsel %vm358, %v317, 0.0
    %v527 = vadd.f32 %v525, %v526
    %v528 = vsel %vm358, %v318, 0.0
    %v529 = vadd.f32 %v527, %v528
    %v530 = vsel %vm358, %v319, 0.0
    %v531 = vadd.f32 %v529, %v530
    %v532 = vsel %vm358, %v320, 0.0
    %v533 = vadd.f32 %v531, %v532
    %v534 = vsel %vm358, %v321, 0.0
    %v535 = vadd.f32 %v533, %v534
    %v536 = vsel %vm358, %v322, 0.0
    %v537 = vadd.f32 %v535, %v536
    %v538 = vsel %vm358, %v323, 0.0
    %v539 = vadd.f32 %v537, %v538
    %v540 = vsel %vm358, %v324, 0.0
    %v541 = vadd.f32 %v539, %v540
    %v542 = vsel %vm358, %v325, 0.0
    %v543 = vadd.f32 %v541, %v542
    %v544 = vsel %vm358, %v326, 0.0
    %v545 = vadd.f32 %v543, %v544
    %v546 = vsel %vm358, %v327, 0.0
    %v547 = vadd.f32 %v545, %v546
    %v548 = vsel %vm358, %v328, 0.0
    %v549 = vadd.f32 %v547, %v548
    %v550 = vsel %vm358, %v329, 0.0
    %v551 = vadd.f32 %v549, %v550
    %v552 = vsel %vm358, %v330, 0.0
    %v553 = vadd.f32 %v551, %v552
    %v554 = vsel %vm358, %v331, 0.0
    %v555 = vadd.f32 %v553, %v554
    %v556 = vsel %vm358, %v332, 0.0
    %v557 = vadd.f32 %v555, %v556
    %v558 = vsel %vm358, %v333, 0.0
    %v559 = vadd.f32 %v557, %v558
    %v560 = vsel %vm358, %v334, 0.0
    %v561 = vadd.f32 %v559, %v560
    %v562 = vsel %vm358, %v335, 0.0
    %v563 = vadd.f32 %v561, %v562
    %v564 = vsel %vm358, %v336, 0.0
    %v565 = vadd.f32 %v563, %v564
    %v566 = vsel %vm358, %v337, 0.0
    %v567 = vadd.f32 %v565, %v566
    %v568 = vsel %vm358, %v338, 0.0
    %v569 = vadd.f32 %v567, %v568
    %v570 = vsel %vm358, %v339, 0.0
    %v571 = vadd.f32 %v569, %v570
    %v572 = vsel %vm358, %v340, 0.0
    %v573 = vadd.f32 %v571, %v572
    %v574 = vsel %vm358, %v341, 0.0
    %v575 = vadd.f32 %v573, %v574
    %v576 = vsel %vm358, %v342, 0.0
    %v577 = vadd.f32 %v575, %v576
    %v578 = vsel %vm358, %v343, 0.0
    %v579 = vadd.f32 %v577, %v578
    %v580 = vsel %vm358, %v344, 0.0
    %v581 = vadd.f32 %v579, %v580
    %v582 = vsel %vm358, %v345, 0.0
    %v583 = vadd.f32 %v581, %v582
    %v584 = vsel %vm358, %v346, 0.0
    %v585 = vadd.f32 %v583, %v584
    %v586 = vsel %vm358, %v347, 0.0
    %v587 = vadd.f32 %v585, %v586
    %v588 = vsel %vm358, %v348, 0.0
    %v589 = vadd.f32 %v587, %v588
    %v590 = vsel %vm358, %v349, 0.0
    %v591 = vadd.f32 %v589, %v590
    %v592 = vsel %vm358, %v350, 0.0
    %v593 = vadd.f32 %v591, %v592
    %v594 = vsel %vm358, %v351, 0.0
    %v595 = vadd.f32 %v593, %v594
    %v596 = vsel %vm358, %v352, 0.0
    %v597 = vadd.f32 %v595, %v596
    %v598 = vsel %vm358, %v353, 0.0
    %v599 = vadd.f32 %v597, %v598
    %v600 = vsel %vm358, %v354, 0.0
    %v601 = vadd.f32 %v599, %v600
    %v602 = vsel %vm358, %v355, 0.0
    %v603 = vadd.f32 %v601, %v602
    %v604 = vsel %vm358, %v356, 0.0
    %v605 = vadd.f32 %v603, %v604
    %v606 = vsel %vm358, %v357, 0.0
    %v607 = vadd.f32 %v605, %v606
    %v608 = vrot.slane %v607, 4
    %v609 = vadd.f32 %v607, %v608
    %v610 = vrot.slane %v609, 2
    %v611 = vadd.f32 %v609, %v610
    %v612 = vrot.slane %v611, 1
    %v613 = vadd.f32 %v611, %v612
    %v614 = vadd.f32 %v232, %v613
    %vm615 = vcmask 122880
    %616 = vst.msk [vmem:[#allocation2] sm:$0x1] %vm615, %v614
    %v617 = vld [vmem:[#allocation4] sm:$0xff]
    %v618 = vld [vmem:[#allocation4 + $0x8] sm:$0xff]
    %619 = vxpose.xlu0.c.b16.start [1/8] %v169, 128
    %620 = vxpose.xlu0.c.b16.cont [2/8] %v170, 128
    %621 = vxpose.xlu0.c.b16.cont [3/8] %v171, 128
    %622 = vxpose.xlu0.c.b16.cont [4/8] %v172, 128
    %623 = vxpose.xlu0.c.b16.cont [5/8] %v173, 128
    %624 = vxpose.xlu0.c.b16.cont [6/8] %v174, 128
    %625 = vxpose.xlu0.c.b16.cont [7/8] %v175, 128
    %626 = vxpose.xlu0.c.b16.end [8/8] %v176, 128
    %v627 = vpop.trf.xlu0
    %v628 = vpop.trf.xlu0
    %v629 = vpop.trf.xlu0
    %v630 = vpop.trf.xlu0
    %v631 = vpop.trf.xlu0
    %v632 = vpop.trf.xlu0
    %v633 = vpop.trf.xlu0
    %v634 = vpop.trf.xlu0
    %635 = vxpose.xlu0.c.b16.start [1/8] %v177, 128
    %636 = vxpose.xlu0.c.b16.cont [2/8] %v178, 128
    %637 = vxpose.xlu0.c.b16.cont [3/8] %v179, 128
    %638 = vxpose.xlu0.c.b16.cont [4/8] %v180, 128
    %639 = vxpose.xlu0.c.b16.cont [5/8] %v181, 128
    %640 = vxpose.xlu0.c.b16.cont [6/8] %v182, 128
    %641 = vxpose.xlu0.c.b16.cont [7/8] %v183, 128
    %642 = vxpose.xlu0.c.b16.end [8/8] %v184, 128
    %v643 = vpop.trf.xlu0
    %v644 = vpop.trf.xlu0
    %v645 = vpop.trf.xlu0
    %v646 = vpop.trf.xlu0
    %v647 = vpop.trf.xlu0
    %v648 = vpop.trf.xlu0
    %v649 = vpop.trf.xlu0
    %v650 = vpop.trf.xlu0
    %651 = vxpose.xlu0.c.b16.start [1/8] %v185, 128
    %652 = vxpose.xlu0.c.b16.cont [2/8] %v186, 128
    %653 = vxpose.xlu0.c.b16.cont [3/8] %v187, 128
    %654 = vxpose.xlu0.c.b16.cont [4/8] %v188, 128
    %655 = vxpose.xlu0.c.b16.cont [5/8] %v189, 128
    %656 = vxpose.xlu0.c.b16.cont [6/8] %v190, 128
    %657 = vxpose.xlu0.c.b16.cont [7/8] %v191, 128
    %658 = vxpose.xlu0.c.b16.end [8/8] %v192, 128
    %v659 = vpop.trf.xlu0
    %v660 = vpop.trf.xlu0
    %v661 = vpop.trf.xlu0
    %v662 = vpop.trf.xlu0
    %v663 = vpop.trf.xlu0
    %v664 = vpop.trf.xlu0
    %v665 = vpop.trf.xlu0
    %v666 = vpop.trf.xlu0
    %667 = vxpose.xlu0.c.b16.start [1/8] %v193, 128
    %668 = vxpose.xlu0.c.b16.cont [2/8] %v194, 128
    %669 = vxpose.xlu0.c.b16.cont [3/8] %v195, 128
    %670 = vxpose.xlu0.c.b16.cont [4/8] %v196, 128
    %671 = vxpose.xlu0.c.b16.cont [5/8] %v197, 128
    %672 = vxpose.xlu0.c.b16.cont [6/8] %v198, 128
    %673 = vxpose.xlu0.c.b16.cont [7/8] %v199, 128
    %674 = vxpose.xlu0.c.b16.end [8/8] %v200, 128
    %v675 = vpop.trf.xlu0
    %v676 = vpop.trf.xlu0
    %v677 = vpop.trf.xlu0
    %v678 = vpop.trf.xlu0
    %v679 = vpop.trf.xlu0
    %v680 = vpop.trf.xlu0
    %v681 = vpop.trf.xlu0
    %v682 = vpop.trf.xlu0
    %683 = vxpose.xlu0.c.b16.start [1/8] %v201, 128
    %684 = vxpose.xlu0.c.b16.cont [2/8] %v202, 128
    %685 = vxpose.xlu0.c.b16.cont [3/8] %v203, 128
    %686 = vxpose.xlu0.c.b16.cont [4/8] %v204, 128
    %687 = vxpose.xlu0.c.b16.cont [5/8] %v205, 128
    %688 = vxpose.xlu0.c.b16.cont [6/8] %v206, 128
    %689 = vxpose.xlu0.c.b16.cont [7/8] %v207, 128
    %690 = vxpose.xlu0.c.b16.end [8/8] %v208, 128
    %v691 = vpop.trf.xlu0
    %v692 = vpop.trf.xlu0
    %v693 = vpop.trf.xlu0
    %v694 = vpop.trf.xlu0
    %v695 = vpop.trf.xlu0
    %v696 = vpop.trf.xlu0
    %v697 = vpop.trf.xlu0
    %v698 = vpop.trf.xlu0
    %699 = vxpose.xlu0.c.b16.start [1/8] %v209, 128
    %700 = vxpose.xlu0.c.b16.cont [2/8] %v210, 128
    %701 = vxpose.xlu0.c.b16.cont [3/8] %v211, 128
    %702 = vxpose.xlu0.c.b16.cont [4/8] %v212, 128
    %703 = vxpose.xlu0.c.b16.cont [5/8] %v213, 128
    %704 = vxpose.xlu0.c.b16.cont [6/8] %v214, 128
    %705 = vxpose.xlu0.c.b16.cont [7/8] %v215, 128
    %706 = vxpose.xlu0.c.b16.end [8/8] %v216, 128
    %v707 = vpop.trf.xlu0
    %v708 = vpop.trf.xlu0
    %v709 = vpop.trf.xlu0
    %v710 = vpop.trf.xlu0
    %v711 = vpop.trf.xlu0
    %v712 = vpop.trf.xlu0
    %v713 = vpop.trf.xlu0
    %v714 = vpop.trf.xlu0
    %715 = vxpose.xlu0.c.b16.start [1/8] %v217, 128
    %716 = vxpose.xlu0.c.b16.cont [2/8] %v218, 128
    %717 = vxpose.xlu0.c.b16.cont [3/8] %v219, 128
    %718 = vxpose.xlu0.c.b16.cont [4/8] %v220, 128
    %719 = vxpose.xlu0.c.b16.cont [5/8] %v221, 128
    %720 = vxpose.xlu0.c.b16.cont [6/8] %v222, 128
    %721 = vxpose.xlu0.c.b16.cont [7/8] %v223, 128
    %722 = vxpose.xlu0.c.b16.end [8/8] %v224, 128
    %v723 = vpop.trf.xlu0
    %v724 = vpop.trf.xlu0
    %v725 = vpop.trf.xlu0
    %v726 = vpop.trf.xlu0
    %v727 = vpop.trf.xlu0
    %v728 = vpop.trf.xlu0
    %v729 = vpop.trf.xlu0
    %v730 = vpop.trf.xlu0
    %731 = vxpose.xlu0.c.b16.start [1/8] %v225, 128
    %732 = vxpose.xlu0.c.b16.cont [2/8] %v226, 128
    %733 = vxpose.xlu0.c.b16.cont [3/8] %v227, 128
    %734 = vxpose.xlu0.c.b16.cont [4/8] %v228, 128
    %735 = vxpose.xlu0.c.b16.cont [5/8] %v229, 128
    %736 = vxpose.xlu0.c.b16.cont [6/8] %v230, 128
    %737 = vxpose.xlu0.c.b16.cont [7/8] %v231, 128
    %738 = vxpose.xlu0.c.b16.end [8/8] 0, 128
    %v739 = vpop.trf.xlu0
    %v740 = vpop.trf.xlu0
    %v741 = vpop.trf.xlu0
    %v742 = vpop.trf.xlu0
    %v743 = vpop.trf.xlu0
    %v744 = vpop.trf.xlu0
    %v745 = vpop.trf.xlu0
    %v746 = vpop.trf.xlu0
    %vm747 = vcmask 850944
    %v749 = vsel %vm747, %v739, 0
    %vm751 = vcmask 1043456
    %v753 = vsel %vm751, %v231, 0
    %755 = vmatpush.bf16.msra.mxu0 %v176
    %756 = vmatpush.bf16.msra.mxu0 %v175
    %757 = vmatpush.bf16.msra.mxu0 %v174
    %758 = vmatpush.bf16.msra.mxu0 %v173
    %759 = vmatpush.bf16.msra.mxu0 %v172
    %760 = vmatpush.bf16.msra.mxu0 %v171
    %761 = vmatpush.bf16.msra.mxu0 %v170
    %762 = vmatpush.bf16.msra.mxu0 %v169
    %763 = vmatmul.bf16.gmra.mxu0 %v627
    %v764 = vpop.f32.mrf.mxu0
    %v765 = vadd.f32 0.0, %v764
    %v766 = vpop.f32.mrf.mxu0
    %v767 = vadd.f32 0.0, %v766
    %768 = vdwg.mxu0
    %769 = vmatpush.bf16.msra.mxu0 %v184
    %770 = vmatpush.bf16.msra.mxu0 %v183
    %771 = vmatpush.bf16.msra.mxu0 %v182
    %772 = vmatpush.bf16.msra.mxu0 %v181
    %773 = vmatpush.bf16.msra.mxu0 %v180
    %774 = vmatpush.bf16.msra.mxu0 %v179
    %775 = vmatpush.bf16.msra.mxu0 %v178
    %776 = vmatpush.bf16.msra.mxu0 %v177
    %777 = vmatmul.bf16.gmra.mxu0 %v643
    %v778 = vpop.f32.mrf.mxu0
    %v779 = vadd.f32 %v765, %v778
    %v780 = vpop.f32.mrf.mxu0
    %v781 = vadd.f32 %v767, %v780
    %782 = vdwg.mxu0
    %783 = vmatpush.bf16.msra.mxu0 %v192
    %784 = vmatpush.bf16.msra.mxu0 %v191
    %785 = vmatpush.bf16.msra.mxu0 %v190
    %786 = vmatpush.bf16.msra.mxu0 %v189
    %787 = vmatpush.bf16.msra.mxu0 %v188
    %788 = vmatpush.bf16.msra.mxu0 %v187
    %789 = vmatpush.bf16.msra.mxu0 %v186
    %790 = vmatpush.bf16.msra.mxu0 %v185
    %791 = vmatmul.bf16.gmra.mxu0 %v659
    %v792 = vpop.f32.mrf.mxu0
    %v793 = vadd.f32 %v779, %v792
    %v794 = vpop.f32.mrf.mxu0
    %v795 = vadd.f32 %v781, %v794
    %796 = vdwg.mxu0
    %797 = vmatpush.bf16.msra.mxu0 %v200
    %798 = vmatpush.bf16.msra.mxu0 %v199
    %799 = vmatpush.bf16.msra.mxu0 %v198
    %800 = vmatpush.bf16.msra.mxu0 %v197
    %801 = vmatpush.bf16.msra.mxu0 %v196
    %802 = vmatpush.bf16.msra.mxu0 %v195
    %803 = vmatpush.bf16.msra.mxu0 %v194
    %804 = vmatpush.bf16.msra.mxu0 %v193
    %805 = vmatmul.bf16.gmra.mxu0 %v675
    %v806 = vpop.f32.mrf.mxu0
    %v807 = vadd.f32 %v793, %v806
    %v808 = vpop.f32.mrf.mxu0
    %v809 = vadd.f32 %v795, %v808
    %810 = vdwg.mxu0
    %811 = vmatpush.bf16.msra.mxu0 %v208
    %812 = vmatpush.bf16.msra.mxu0 %v207
    %813 = vmatpush.bf16.msra.mxu0 %v206
    %814 = vmatpush.bf16.msra.mxu0 %v205
    %815 = vmatpush.bf16.msra.mxu0 %v204
    %816 = vmatpush.bf16.msra.mxu0 %v203
    %817 = vmatpush.bf16.msra.mxu0 %v202
    %818 = vmatpush.bf16.msra.mxu0 %v201
    %819 = vmatmul.bf16.gmra.mxu0 %v691
    %v820 = vpop.f32.mrf.mxu0
    %v821 = vadd.f32 %v807, %v820
    %v822 = vpop.f32.mrf.mxu0
    %v823 = vadd.f32 %v809, %v822
    %824 = vdwg.mxu0
    %825 = vmatpush.bf16.msra.mxu0 %v216
    %826 = vmatpush.bf16.msra.mxu0 %v215
    %827 = vmatpush.bf16.msra.mxu0 %v214
    %828 = vmatpush.bf16.msra.mxu0 %v213
    %829 = vmatpush.bf16.msra.mxu0 %v212
    %830 = vmatpush.bf16.msra.mxu0 %v211
    %831 = vmatpush.bf16.msra.mxu0 %v210
    %832 = vmatpush.bf16.msra.mxu0 %v209
    %833 = vmatmul.bf16.gmra.mxu0 %v707
    %v834 = vpop.f32.mrf.mxu0
    %v835 = vadd.f32 %v821, %v834
    %v836 = vpop.f32.mrf.mxu0
    %v837 = vadd.f32 %v823, %v836
    %838 = vdwg.mxu0
    %839 = vmatpush.bf16.msra.mxu0 %v224
    %840 = vmatpush.bf16.msra.mxu0 %v223
    %841 = vmatpush.bf16.msra.mxu0 %v222
    %842 = vmatpush.bf16.msra.mxu0 %v221
    %843 = vmatpush.bf16.msra.mxu0 %v220
    %844 = vmatpush.bf16.msra.mxu0 %v219
    %845 = vmatpush.bf16.msra.mxu0 %v218
    %846 = vmatpush.bf16.msra.mxu0 %v217
    %847 = vmatmul.bf16.gmra.mxu0 %v723
    %v848 = vpop.f32.mrf.mxu0
    %v849 = vadd.f32 %v835, %v848
    %v850 = vpop.f32.mrf.mxu0
    %v851 = vadd.f32 %v837, %v850
    %852 = vdwg.mxu0
    %853 = vmatpush.bf16.msra.mxu0 0
    %854 = vmatpush.bf16.msra.mxu0 %v753
    %855 = vmatpush.bf16.msra.mxu0 %v230
    %856 = vmatpush.bf16.msra.mxu0 %v229
    %857 = vmatpush.bf16.msra.mxu0 %v228
    %858 = vmatpush.bf16.msra.mxu0 %v227
    %859 = vmatpush.bf16.msra.mxu0 %v226
    %860 = vmatpush.bf16.msra.mxu0 %v225
    %861 = vmatmul.bf16.gmra.mxu0 %v749
    %v862 = vpop.f32.mrf.mxu0
    %v863 = vadd.f32 %v849, %v862
    %v864 = vpop.f32.mrf.mxu0
    %v865 = vadd.f32 %v851, %v864
    %866 = vdwg.mxu0
    %v867 = vadd.f32 %v617, %v863
    %v868 = vadd.f32 %v618, %v865
    %869 = vst.msk [vmem:[#allocation4] sm:$0xff] %vm358, %v867
    %870 = vst.msk [vmem:[#allocation4 + $0x8] sm:$0xff] %vm358, %v868
    // Predicated region
    $region10: #{tpu_custom_call.1} parent=1 // pred_check
      _
    $region11: #{tpu_custom_call.1} parent=1 // pred_check_branch
      %872 = sbr.rel (0) target = $region13
    $region12: #{tpu_custom_call.1} parent=1 // pred_region
      %874 = vsyncadd [#allocation3], 0
      %s876 = sshll.u32 [#allocation2], 4
      %s877 = int_to_ptr.vmem [resolvable:$true] %s876
      %s878 = sshll.u32 %s1, 4
      %s879 = int_to_ptr.hbm [resolvable:$true] %s878
      %881 = dma.vmem_to_hbm [thread:$0]  %s877, 16, %s879, [#allocation3]
    $region13: #{tpu_custom_call.1} parent=1 // pred_fallthru
      _
    // Predicated region
    $region14: #{tpu_custom_call.1} parent=1 // pred_check
      _
    $region15: #{tpu_custom_call.1} parent=1 // pred_check_branch
      %883 = sbr.rel (0) target = $region17
    $region16: #{tpu_custom_call.1} parent=1 // pred_region
      %885 = vsyncadd [#allocation5], 0
      %s886 = sshll.u32 [#allocation4], 4
      %s887 = int_to_ptr.vmem [resolvable:$true] %s886
      %s888 = sshll.u32 %s2, 4
      %s889 = int_to_ptr.hbm [resolvable:$true] %s888
      %894 = dma.vmem_to_hbm [thread:$0]  %s887, 256, %s889, [#allocation5], 128, 128, 8
    $region17: #{tpu_custom_call.1} parent=1 // pred_fallthru
      _
    // Predicated region
    $region18: #{tpu_custom_call.1} parent=1 // pred_check
      _
    $region19: #{tpu_custom_call.1} parent=1 // pred_check_branch
      %896 = sbr.rel (0) target = $region21
    $region20: #{tpu_custom_call.1} parent=1 // pred_region
      %898 = dma.done [#allocation3], 16
    $region21: #{tpu_custom_call.1} parent=1 // pred_fallthru
      _
    // Predicated region
    $region22: #{tpu_custom_call.1} parent=1 // pred_check
      _
    $region23: #{tpu_custom_call.1} parent=1 // pred_check_branch
      %900 = sbr.rel (0) target = $region25
    $region24: #{tpu_custom_call.1} parent=1 // pred_region
      %902 = dma.done [#allocation5], 256
    $region25: #{tpu_custom_call.1} parent=1 // pred_fallthru
      _
    %903 = vsyncpa [#allocation3], 1
    %904 = vsyncpa [#allocation5], 1

</llo_original>
